<compile_context>
chip_gen: v7x
topology: tpu7x:2x2x1
jax: 0.10.0
libtpu: 0.0.40
codegen_flags: <defaults>
</compile_context>

<pallas_src>
import jax
import jax.numpy as jnp
from jax.experimental import pallas as pl
from jax.experimental.pallas import tpu as pltpu

_LANE = 128


def _round_up(x: int, m: int) -> int:
    return ((x + m - 1) // m) * m


def _cdiv(a: int, b: int) -> int:
    return (a + b - 1) // b


def rvfl_kernel(x_ref, w_ih_ref, b_ih_ref, w_ho_x_ref, w_ho_h_ref, out_ref):
    x = x_ref[...]                                             # (TILE_N, steps)

    # Hidden transform: MXU matmul with f32 accumulation; bias + sigmoid stay
    # f32 (keeps activation math on the VPU/EUP f32 path — matters on v5e).
    pre = jnp.dot(x, w_ih_ref[...], preferred_element_type=jnp.float32)
    pre = pre + b_ih_ref[...]                                  # (1, hidden) bcast
    h = jax.nn.sigmoid(pre)                                    # (TILE_N, hidden) f32

    # Readout: concat([X, H]) @ W_HO folded into two accumulating matmuls — no
    # lane-axis concat copy, no padding of the tiny contraction dims.
    pred = jnp.dot(x, w_ho_x_ref[...], preferred_element_type=jnp.float32)
    pred = pred + jnp.dot(h.astype(w_ho_h_ref.dtype), w_ho_h_ref[...],
                          preferred_element_type=jnp.float32)  # (TILE_N, out_dim)

    out_ref[...] = pred.astype(out_ref.dtype)


def _vmem_limit_bytes() -> int:
    """Arch-aware scoped-VMEM limit: ~half of physical VMEM, clamped."""
    try:
        info = pltpu.get_tpu_info()
        cap = int(getattr(info, "vmem_capacity_bytes", 64 << 20))
    except Exception:  # pragma: no cover - conservative fallback
        cap = 64 << 20
    return max(16 << 20, min(cap // 2, 96 << 20))


def rvfl_forward(x, w_ih, b_ih, w_ho, *, tile_n=4096, compute_dtype=None):
    """RVFL forward: pred = concat([X, sigmoid(X@W_IH + b_IH)]) @ W_HO.

    compute_dtype: optionally cast X / W_IH / W_HO to bf16 for the MXU on
    v6e/v7x (accumulation, bias add and sigmoid stay f32). Default None keeps
    everything f32 (bit-tight vs. the torch reference).
    """
    n, steps = x.shape
    hidden = w_ih.shape[1]
    out_dim = w_ho.shape[1]
    assert w_ih.shape == (steps, hidden)
    assert b_ih.shape == (1, hidden)
    assert w_ho.shape == (steps + hidden, out_dim)

    if compute_dtype is not None:
        x = x.astype(compute_dtype)
        w_ih = w_ih.astype(compute_dtype)
        w_ho = w_ho.astype(compute_dtype)
    b_ih = b_ih.astype(jnp.float32)

    # Split the readout matrix so the kernel never concatenates along lanes.
    w_ho_x = w_ho[:steps]          # (steps, out_dim)
    w_ho_h = w_ho[steps:]          # (hidden, out_dim)

    sublane = 16 if x.dtype == jnp.bfloat16 else 8
    vmem_limit = _vmem_limit_bytes()

    # --- Tile sizing ---------------------------------------------------------
    # X and out blocks live lane-padded (to 128) in VMEM and are double-buffered
    # by the pipeline; keep them under ~half of the scoped VMEM limit.
    x_isz = jnp.dtype(x.dtype).itemsize
    w_isz = jnp.dtype(w_ih.dtype).itemsize
    row_bytes = 2 * (_round_up(steps, _LANE) * x_isz
                     + _round_up(out_dim, _LANE) * 4)
    max_tile = max(sublane, ((vmem_limit // 2) // row_bytes) // sublane * sublane)

    tile_n = min(tile_n, max_tile)
    if n >= 2048:
        # Guarantee >=2 grid steps on large inputs so both v7x TensorCores work.
        tile_n = min(tile_n, _round_up(_cdiv(n, 2), sublane))
    tile_n = min(tile_n, _round_up(n, sublane))        # never bigger than input
    tile_n = max(sublane, _round_up(tile_n, sublane))  # sublane-aligned

    grid = (_cdiv(n, tile_n),)   # ragged last block handled by Pallas (masked)

    flops = 2 * n * (steps * hidden + (steps + hidden) * out_dim)
    bytes_accessed = (n * steps * x_isz                      # X read
                      + steps * hidden * w_isz               # W_IH
                      + hidden * 4                           # b_IH
                      + (steps + hidden) * out_dim * w_isz   # W_HO
                      + n * out_dim * 4)                     # output write
    cost = pl.CostEstimate(flops=flops,
                           transcendentals=n * hidden,
                           bytes_accessed=bytes_accessed)

    out = pl.pallas_call(
        rvfl_kernel,
        out_shape=jax.ShapeDtypeStruct((n, out_dim), jnp.float32),
        grid=grid,
        in_specs=[
            pl.BlockSpec((tile_n, steps), lambda i: (i, 0)),    # X: batch-tiled
            pl.BlockSpec((steps, hidden), lambda i: (0, 0)),    # W_IH resident
            pl.BlockSpec((1, hidden), lambda i: (0, 0)),        # b_IH resident
            pl.BlockSpec((steps, out_dim), lambda i: (0, 0)),   # W_HO[:steps]
            pl.BlockSpec((hidden, out_dim), lambda i: (0, 0)),  # W_HO[steps:]
        ],
        out_specs=pl.BlockSpec((tile_n, out_dim), lambda i: (i, 0)),
        compiler_params=pltpu.CompilerParams(
            dimension_semantics=("parallel",),   # megacore sharding on v7x
            vmem_limit_bytes=vmem_limit,         # arch-dependent scoped limit
        ),
        cost_estimate=cost,
    )(x, w_ih, b_ih, w_ho_x, w_ho_h)

    return out


if __name__ == "__main__":
    # Small, deterministic configuration consistent with RVFL.__init__:
    #   params.steps = input_dim, params.hidden_size, params.H = output_dim.
    batch = 8
    steps = 16          # input_dim
    hidden_size = 32
    output_dim = 4      # params.H
    Lambda = 0.5        # Lambdas[0]

    key = jax.random.PRNGKey(0)
    kx, kw, kb, ko = jax.random.split(key, 4)

    x = jax.random.normal(kx, (batch, steps), dtype=jnp.float32)
    # uniform_(-Lambda, Lambda) init, as in the module.
    weight_IH = jax.random.uniform(kw, (steps, hidden_size),
                                   minval=-Lambda, maxval=Lambda,
                                   dtype=jnp.float32)
    bias_IH = jax.random.uniform(kb, (1, hidden_size),
                                 minval=-Lambda, maxval=Lambda,
                                 dtype=jnp.float32)
    # weight_HO is normally solved by lstsq in xfit; here it is a deterministic
    # synthetic readout weight of the correct shape (steps + hidden, output_dim).
    # TODO(synk): xfit's torch.lstsq solve for weight_HO is host-side training
    # logic, not part of the forward kernel.
    weight_HO = jax.random.normal(ko, (steps + hidden_size, output_dim),
                                  dtype=jnp.float32) * 0.1

    def ref_forward(xx):
        h_ref = jax.nn.sigmoid(xx @ weight_IH + bias_IH)
        return jnp.concatenate([xx, h_ref], axis=1) @ weight_HO

    # 1) Small single-tile run (f32 path keeps a tight correctness check).
    pred = rvfl_forward(x, weight_IH, bias_IH, weight_HO)
    pred = jax.block_until_ready(pred)
    assert pred.shape == (batch, output_dim)
    assert jnp.allclose(pred, ref_forward(x), atol=1e-5, rtol=1e-5)

    # 2) Multi-tile run exercising the cdiv grid + ragged (masked) last block:
    #    N=40 with tile_n=16 -> grid of 3, last block only half-valid.
    big_n = 40
    x_big = jax.random.normal(jax.random.PRNGKey(1), (big_n, steps),
                              dtype=jnp.float32)
    pred_big = rvfl_forward(x_big, weight_IH, bias_IH, weight_HO, tile_n=16)
    pred_big = jax.block_until_ready(pred_big)
    assert pred_big.shape == (big_n, output_dim)
    assert jnp.allclose(pred_big, ref_forward(x_big), atol=1e-5, rtol=1e-5)

    # 3) Non-multiple-of-8 user tile (rounded up internally) still correct.
    pred_odd = rvfl_forward(x_big, weight_IH, bias_IH, weight_HO, tile_n=20)
    pred_odd = jax.block_until_ready(pred_odd)
    assert jnp.allclose(pred_odd, ref_forward(x_big), atol=1e-5, rtol=1e-5)

    print("KERNEL_OK")
</pallas_src>

<mosaic_0001>
module attributes {stable_mosaic.version = 11 : i64} {
  func.func @rvfl_kernel(%arg0: i32, %arg1: memref<8x16xf32, #tpu.memory_space<vmem>>, %arg2: memref<16x32xf32, #tpu.memory_space<vmem>>, %arg3: memref<1x32xf32, #tpu.memory_space<vmem>>, %arg4: memref<16x4xf32, #tpu.memory_space<vmem>>, %arg5: memref<32x4xf32, #tpu.memory_space<vmem>>, %arg6: memref<8x4xf32, #tpu.memory_space<vmem>>) attributes {dimension_semantics = [#tpu.dimension_semantics<parallel>], iteration_bounds = array<i64: 1>, scalar_prefetch = 0 : i64, scratch_operands = 0 : i64, tpu.core_type = #tpu.core_type<tc>, window_params = [{transform_indices = @transform_0, window_bounds = array<i64: 8, 16>}, {pipeline_mode = #tpu.pipeline_mode<synchronous>, transform_indices = @transform_1, window_bounds = array<i64: 16, 32>}, {pipeline_mode = #tpu.pipeline_mode<synchronous>, transform_indices = @transform_2, window_bounds = array<i64: 1, 32>}, {pipeline_mode = #tpu.pipeline_mode<synchronous>, transform_indices = @transform_3, window_bounds = array<i64: 16, 4>}, {pipeline_mode = #tpu.pipeline_mode<synchronous>, transform_indices = @transform_4, window_bounds = array<i64: 32, 4>}, {transform_indices = @transform_5, window_bounds = array<i64: 8, 4>}]} {
    %c0 = arith.constant 0 : index
    %c0_0 = arith.constant 0 : index
    %0 = vector.load %arg1[%c0, %c0_0] : memref<8x16xf32, #tpu.memory_space<vmem>>, vector<8x16xf32>
    %c0_1 = arith.constant 0 : index
    %c0_2 = arith.constant 0 : index
    %1 = vector.load %arg2[%c0_1, %c0_2] : memref<16x32xf32, #tpu.memory_space<vmem>>, vector<16x32xf32>
    %cst = arith.constant dense<0.000000e+00> : vector<8x32xf32>
    %2 = tpu.matmul %0, %1, %cst {dimension_numbers = #tpu.dot_dimension_numbers<[1], [0], [0], [1], [0, 0, 1, 1], [], []>} : vector<8x16xf32>, vector<16x32xf32>, vector<8x32xf32> -> vector<8x32xf32>
    %c0_3 = arith.constant 0 : index
    %c0_4 = arith.constant 0 : index
    %3 = vector.load %arg3[%c0_3, %c0_4] : memref<1x32xf32, #tpu.memory_space<vmem>>, vector<1x32xf32>
    %4 = vector.broadcast %3 : vector<1x32xf32> to vector<8x32xf32>
    %5 = arith.addf %2, %4 : vector<8x32xf32>
    %6 = arith.negf %5 : vector<8x32xf32>
    %7 = math.exp %6 : vector<8x32xf32>
    %cst_5 = arith.constant 1.000000e+00 : f32
    %8 = vector.broadcast %cst_5 : f32 to vector<8x32xf32>
    %9 = arith.addf %8, %7 : vector<8x32xf32>
    %10 = arith.divf %8, %9 : vector<8x32xf32>
    %c0_6 = arith.constant 0 : index
    %c0_7 = arith.constant 0 : index
    %11 = vector.load %arg4[%c0_6, %c0_7] : memref<16x4xf32, #tpu.memory_space<vmem>>, vector<16x4xf32>
    %cst_8 = arith.constant dense<0.000000e+00> : vector<8x4xf32>
    %12 = tpu.matmul %0, %11, %cst_8 {dimension_numbers = #tpu.dot_dimension_numbers<[1], [0], [0], [1], [0, 0, 1, 1], [], []>} : vector<8x16xf32>, vector<16x4xf32>, vector<8x4xf32> -> vector<8x4xf32>
    %c0_9 = arith.constant 0 : index
    %c0_10 = arith.constant 0 : index
    %13 = vector.load %arg5[%c0_9, %c0_10] : memref<32x4xf32, #tpu.memory_space<vmem>>, vector<32x4xf32>
    %cst_11 = arith.constant dense<0.000000e+00> : vector<8x4xf32>
    %14 = tpu.matmul %10, %13, %cst_11 {dimension_numbers = #tpu.dot_dimension_numbers<[1], [0], [0], [1], [0, 0, 1, 1], [], []>} : vector<8x32xf32>, vector<32x4xf32>, vector<8x4xf32> -> vector<8x4xf32>
    %15 = arith.addf %12, %14 : vector<8x4xf32>
    %c0_12 = arith.constant 0 : index
    %c0_13 = arith.constant 0 : index
    %16 = vector.load %arg6[%c0_12, %c0_13] : memref<8x4xf32, #tpu.memory_space<vmem>>, vector<8x4xf32>
    tpu.vector_store %arg6[%c0_12, %c0_13], %15 {strides = array<i32>} : memref<8x4xf32, #tpu.memory_space<vmem>>, vector<8x4xf32>,
    return
  }
  func.func @transform_0(%arg0: i32) -> (i32, i32) {
    %c0_i32 = arith.constant 0 : i32
    %c0_i32_0 = arith.constant 0 : i32
    return %arg0, %c0_i32 : i32, i32
  }
  func.func @transform_1(%arg0: i32) -> (i32, i32) {
    %c0_i32 = arith.constant 0 : i32
    %c0_i32_0 = arith.constant 0 : i32
    %c0_i32_1 = arith.constant 0 : i32
    return %c0_i32, %c0_i32_0 : i32, i32
  }
  func.func @transform_2(%arg0: i32) -> (i32, i32) {
    %c0_i32 = arith.constant 0 : i32
    %c0_i32_0 = arith.constant 0 : i32
    %c0_i32_1 = arith.constant 0 : i32
    return %c0_i32, %c0_i32_0 : i32, i32
  }
  func.func @transform_3(%arg0: i32) -> (i32, i32) {
    %c0_i32 = arith.constant 0 : i32
    %c0_i32_0 = arith.constant 0 : i32
    %c0_i32_1 = arith.constant 0 : i32
    return %c0_i32, %c0_i32_0 : i32, i32
  }
  func.func @transform_4(%arg0: i32) -> (i32, i32) {
    %c0_i32 = arith.constant 0 : i32
    %c0_i32_0 = arith.constant 0 : i32
    %c0_i32_1 = arith.constant 0 : i32
    return %c0_i32, %c0_i32_0 : i32, i32
  }
  func.func @transform_5(%arg0: i32) -> (i32, i32) {
    %c0_i32 = arith.constant 0 : i32
    %c0_i32_0 = arith.constant 0 : i32
    return %arg0, %c0_i32 : i32, i32
  }
}

</mosaic_0001>

<llo_original>
// kernel: tpu_custom_call.1
$region0: #{tpu_custom_call.1}
  #allocation0 [shape = 'u32[]', space=smem, size = 0x4, offset = 0x4, fixed_abs, tag = 'smem constant byte address 0x4 - core index']
  #allocation1 [shape = 'u32[144,128]{1,0:T(1,128)}', space=vmem, size = 0x12000, scoped, tag = 'internal scratch']
  %s0 = inlined_call_operand.vmem [shape: f32[8,16], index: 0, kind: input, shape index: {}]
  %s1 = inlined_call_operand.vmem [shape: f32[16,32], index: 1, kind: input, shape index: {}]
  %s2 = inlined_call_operand.vmem [shape: f32[1,32], index: 2, kind: input, shape index: {}]
  %s3 = inlined_call_operand.vmem [shape: f32[16,4], index: 3, kind: input, shape index: {}]
  %s4 = inlined_call_operand.vmem [shape: f32[32,4], index: 4, kind: input, shape index: {}]
  %s5 = inlined_call_operand.vmem [shape: f32[8,4], index: 5, kind: output, shape index: {}]
  %s6 = sld [smem:[#allocation0]]
  $region30: #{tpu_custom_call.1} parent=0
    _
  %s8 = ssub.s32 1, %s6
  %s9 = scalar_select 0, %s8, %s6
  // Predicated region
  $region2: #{tpu_custom_call.1} parent=0 // pred_check
    _
  $region3: #{tpu_custom_call.1} parent=0 // pred_check_branch
    %11 = sbr.rel (0) target = $region5
  $region4: #{tpu_custom_call.1} parent=0 // pred_region
    _
  $region5: #{tpu_custom_call.1} parent=0 // pred_fallthru
    _
  // Predicated region
  $region6: #{tpu_custom_call.1} parent=0 // pred_check
    _
  $region7: #{tpu_custom_call.1} parent=0 // pred_check_branch
    %13 = sbr.rel (0) target = $region9
  $region8: #{tpu_custom_call.1} parent=0 // pred_region
    _
  $region9: #{tpu_custom_call.1} parent=0 // pred_fallthru
    _
  // Predicated region
  $region10: #{tpu_custom_call.1} parent=0 // pred_check
    _
  $region11: #{tpu_custom_call.1} parent=0 // pred_check_branch
    %15 = sbr.rel (0) target = $region13
  $region12: #{tpu_custom_call.1} parent=0 // pred_region
    _
  $region13: #{tpu_custom_call.1} parent=0 // pred_fallthru
    _
  // Predicated region
  $region14: #{tpu_custom_call.1} parent=0 // pred_check
    _
  $region15: #{tpu_custom_call.1} parent=0 // pred_check_branch
    %17 = sbr.rel (0) target = $region17
  $region16: #{tpu_custom_call.1} parent=0 // pred_region
    _
  $region17: #{tpu_custom_call.1} parent=0 // pred_fallthru
    _
  // Predicated region
  $region18: #{tpu_custom_call.1} parent=0 // pred_check
    _
  $region19: #{tpu_custom_call.1} parent=0 // pred_check_branch
    %19 = sbr.rel (0) target = $region21
  $region20: #{tpu_custom_call.1} parent=0 // pred_region
    _
  $region21: #{tpu_custom_call.1} parent=0 // pred_fallthru
    _
  %v20 = vld [vmem:[%s0] sm:$0xff]
  %v21 = vld [vmem:[%s1] sm:$0xff]
  %v22 = vld [vmem:[%s1 + $0x8] sm:$0xff]
  %v23 = vld [vmem:[%s2] sm:$0x1]
  %v25 = vlaneseq
  %v26 = vshrl.u32 %v25, 7
  %v27 = vsub.s32 0, %v26
  %v28 = vrot.slane %v23, %v27
  %vm30 = vcmask 130048
  %v32 = vsel %vm30, %v20, 0
  %34 = vmatprep.subr.mxu0 0.0
  %35 = vmatpush1.msra.mxu0 %v21
  %36 = vmatprep.subr.mxu0 0.0
  %37 = vmatpush1.msra.mxu0 %v22
  %38 = vmatprep.subr.mxu0 0.0
  %39 = vmatpush1.msra.mxu0 0.0
  %40 = vmatprep.subr.mxu0 0.0
  %41 = vmatpush1.msra.mxu0 0.0
  %42 = vmatprep.subr.mxu0 0.0
  %43 = vmatpush1.msra.mxu0 0.0
  %44 = vmatprep.subr.mxu0 0.0
  %45 = vmatpush1.msra.mxu0 0.0
  %46 = vmatprep.subr.mxu0 0.0
  %47 = vmatpush1.msra.mxu0 0.0
  %48 = vmatprep.subr.mxu0 0.0
  %49 = vmatpush1.msra.mxu0 0.0
  %50 = vmatprep.subr.mxu0 0.0
  %51 = vmatpush1.msra.mxu0 0.0
  %52 = vmatprep.subr.mxu0 0.0
  %53 = vmatpush1.msra.mxu0 0.0
  %54 = vmatprep.subr.mxu0 0.0
  %55 = vmatpush1.msra.mxu0 0.0
  %56 = vmatprep.subr.mxu0 0.0
  %57 = vmatpush1.msra.mxu0 0.0
  %58 = vmatprep.subr.mxu0 0.0
  %59 = vmatpush1.msra.mxu0 0.0
  %60 = vmatprep.subr.mxu0 0.0
  %61 = vmatpush1.msra.mxu0 0.0
  %62 = vmatprep.subr.mxu0 0.0
  %63 = vmatpush1.msra.mxu0 0.0
  %64 = vmatprep.subr.mxu0 0.0
  %65 = vmatpush1.msra.mxu0 0.0
  %66 = vmatprep.subr.mxu0 0.0
  %67 = vmatpush1.msra.mxu0 0.0
  %68 = vmatprep.subr.mxu0 0.0
  %69 = vmatpush1.msra.mxu0 0.0
  %70 = vmatprep.subr.mxu0 0.0
  %71 = vmatpush1.msra.mxu0 0.0
  %72 = vmatprep.subr.mxu0 0.0
  %73 = vmatpush1.msra.mxu0 0.0
  %74 = vmatprep.subr.mxu0 0.0
  %75 = vmatpush1.msra.mxu0 0.0
  %76 = vmatprep.subr.mxu0 0.0
  %77 = vmatpush1.msra.mxu0 0.0
  %78 = vmatprep.subr.mxu0 0.0
  %79 = vmatpush1.msra.mxu0 0.0
  %80 = vmatprep.subr.mxu0 0.0
  %81 = vmatpush1.msra.mxu0 0.0
  %82 = vmatprep.subr.mxu0 0.0
  %83 = vmatpush1.msra.mxu0 0.0
  %84 = vmatprep.subr.mxu0 0.0
  %85 = vmatpush1.msra.mxu0 0.0
  %86 = vmatprep.subr.mxu0 0.0
  %87 = vmatpush1.msra.mxu0 0.0
  %88 = vmatprep.subr.mxu0 0.0
  %89 = vmatpush1.msra.mxu0 0.0
  %90 = vmatprep.subr.mxu0 0.0
  %91 = vmatpush1.msra.mxu0 0.0
  %92 = vmatprep.subr.mxu0 0.0
  %93 = vmatpush1.msra.mxu0 0.0
  %94 = vmatprep.subr.mxu0 0.0
  %95 = vmatpush1.msra.mxu0 0.0
  %96 = vmatprep.subr.mxu0 0.0
  %97 = vmatpush1.msra.mxu0 0.0
  %98 = vmatprep.mubr.f32.mxu0 0.0
  %99 = vmatmul.mubr.f32.gmra.mrb[0].mxu0 %v32
  %v100 = vpop.f32.mrb[0].mxu0
  %v101 = vadd.f32 %v28, %v100
  %v102 = vpop.f32.mrb[0].mxu0
  %103 = vdwg.mxu0
  %v104 = vxor.u32 %v101, 2147483648
  %v105 = vmul.f32 %v104, 1.442695
  %v106 = vpow.pop %v105
  %v107 = vadd.f32 %v106, 1.0
  %v108 = vrcp.pop %v107
  %v109 = vmul.f32 1.0, %v108
  %v110 = vld [vmem:[%s3] sm:$0xff]
  %v111 = vld [vmem:[%s3 + $0x8] sm:$0xff]
  %v112 = vld [vmem:[%s4] sm:$0xff]
  %v113 = vld [vmem:[%s4 + $0x8] sm:$0xff]
  %v114 = vld [vmem:[%s4 + $0x10] sm:$0xff]
  %v115 = vld [vmem:[%s4 + $0x18] sm:$0xff]
  %vm116 = vcmask 261120
  %v118 = vsel %vm116, %v109, 0
  %120 = vmatprep.subr.mxu0 0.0
  %121 = vmatpush1.msra.mxu0 %v112
  %122 = vmatprep.subr.mxu0 0.0
  %123 = vmatpush1.msra.mxu0 %v113
  %124 = vmatprep.subr.mxu0 0.0
  %125 = vmatpush1.msra.mxu0 %v114
  %126 = vmatprep.subr.mxu0 0.0
  %127 = vmatpush1.msra.mxu0 %v115
  %128 = vmatprep.subr.mxu0 0.0
  %129 = vmatpush1.msra.mxu0 0.0
  %130 = vmatprep.subr.mxu0 0.0
  %131 = vmatpush1.msra.mxu0 0.0
  %132 = vmatprep.subr.mxu0 0.0
  %133 = vmatpush1.msra.mxu0 0.0
  %134 = vmatprep.subr.mxu0 0.0
  %135 = vmatpush1.msra.mxu0 0.0
  %136 = vmatprep.subr.mxu0 0.0
  %137 = vmatpush1.msra.mxu0 0.0
  %138 = vmatprep.subr.mxu0 0.0
  %139 = vmatpush1.msra.mxu0 0.0
  %140 = vmatprep.subr.mxu0 0.0
  %141 = vmatpush1.msra.mxu0 0.0
  %142 = vmatprep.subr.mxu0 0.0
  %143 = vmatpush1.msra.mxu0 0.0
  %144 = vmatprep.subr.mxu0 0.0
  %145 = vmatpush1.msra.mxu0 0.0
  %146 = vmatprep.subr.mxu0 0.0
  %147 = vmatpush1.msra.mxu0 0.0
  %148 = vmatprep.subr.mxu0 0.0
  %149 = vmatpush1.msra.mxu0 0.0
  %150 = vmatprep.subr.mxu0 0.0
  %151 = vmatpush1.msra.mxu0 0.0
  %152 = vmatprep.subr.mxu0 0.0
  %153 = vmatpush1.msra.mxu0 0.0
  %154 = vmatprep.subr.mxu0 0.0
  %155 = vmatpush1.msra.mxu0 0.0
  %156 = vmatprep.subr.mxu0 0.0
  %157 = vmatpush1.msra.mxu0 0.0
  %158 = vmatprep.subr.mxu0 0.0
  %159 = vmatpush1.msra.mxu0 0.0
  %160 = vmatprep.subr.mxu0 0.0
  %161 = vmatpush1.msra.mxu0 0.0
  %162 = vmatprep.subr.mxu0 0.0
  %163 = vmatpush1.msra.mxu0 0.0
  %164 = vmatprep.subr.mxu0 0.0
  %165 = vmatpush1.msra.mxu0 0.0
  %166 = vmatprep.subr.mxu0 0.0
  %167 = vmatpush1.msra.mxu0 0.0
  %168 = vmatprep.subr.mxu0 0.0
  %169 = vmatpush1.msra.mxu0 0.0
  %170 = vmatprep.subr.mxu0 0.0
  %171 = vmatpush1.msra.mxu0 0.0
  %172 = vmatprep.subr.mxu0 0.0
  %173 = vmatpush1.msra.mxu0 0.0
  %174 = vmatprep.subr.mxu0 0.0
  %175 = vmatpush1.msra.mxu0 0.0
  %176 = vmatprep.subr.mxu0 0.0
  %177 = vmatpush1.msra.mxu0 0.0
  %178 = vmatprep.subr.mxu0 0.0
  %179 = vmatpush1.msra.mxu0 0.0
  %180 = vmatprep.subr.mxu0 0.0
  %181 = vmatpush1.msra.mxu0 0.0
  %182 = vmatprep.subr.mxu0 0.0
  %183 = vmatpush1.msra.mxu0 0.0
  %184 = vmatprep.mubr.f32.mxu0 0.0
  %185 = vmatmul.mubr.f32.gmra.mrb[0].mxu0 %v118
  %v186 = vpop.f32.mrb[0].mxu0
  %v187 = vadd.f32 0.0, %v186
  %v188 = vpop.f32.mrb[0].mxu0
  %189 = vdwg.mxu0
  %190 = vmatprep.subr.mxu0 0.0
  %191 = vmatpush1.msra.mxu0 %v110
  %192 = vmatprep.subr.mxu0 0.0
  %193 = vmatpush1.msra.mxu0 %v111
  %194 = vmatprep.subr.mxu0 0.0
  %195 = vmatpush1.msra.mxu0 0.0
  %196 = vmatprep.subr.mxu0 0.0
  %197 = vmatpush1.msra.mxu0 0.0
  %198 = vmatprep.subr.mxu0 0.0
  %199 = vmatpush1.msra.mxu0 0.0
  %200 = vmatprep.subr.mxu0 0.0
  %201 = vmatpush1.msra.mxu0 0.0
  %202 = vmatprep.subr.mxu0 0.0
  %203 = vmatpush1.msra.mxu0 0.0
  %204 = vmatprep.subr.mxu0 0.0
  %205 = vmatpush1.msra.mxu0 0.0
  %206 = vmatprep.subr.mxu0 0.0
  %207 = vmatpush1.msra.mxu0 0.0
  %208 = vmatprep.subr.mxu0 0.0
  %209 = vmatpush1.msra.mxu0 0.0
  %210 = vmatprep.subr.mxu0 0.0
  %211 = vmatpush1.msra.mxu0 0.0
  %212 = vmatprep.subr.mxu0 0.0
  %213 = vmatpush1.msra.mxu0 0.0
  %214 = vmatprep.subr.mxu0 0.0
  %215 = vmatpush1.msra.mxu0 0.0
  %216 = vmatprep.subr.mxu0 0.0
  %217 = vmatpush1.msra.mxu0 0.0
  %218 = vmatprep.subr.mxu0 0.0
  %219 = vmatpush1.msra.mxu0 0.0
  %220 = vmatprep.subr.mxu0 0.0
  %221 = vmatpush1.msra.mxu0 0.0
  %222 = vmatprep.subr.mxu0 0.0
  %223 = vmatpush1.msra.mxu0 0.0
  %224 = vmatprep.subr.mxu0 0.0
  %225 = vmatpush1.msra.mxu0 0.0
  %226 = vmatprep.subr.mxu0 0.0
  %227 = vmatpush1.msra.mxu0 0.0
  %228 = vmatprep.subr.mxu0 0.0
  %229 = vmatpush1.msra.mxu0 0.0
  %230 = vmatprep.subr.mxu0 0.0
  %231 = vmatpush1.msra.mxu0 0.0
  %232 = vmatprep.subr.mxu0 0.0
  %233 = vmatpush1.msra.mxu0 0.0
  %234 = vmatprep.subr.mxu0 0.0
  %235 = vmatpush1.msra.mxu0 0.0
  %236 = vmatprep.subr.mxu0 0.0
  %237 = vmatpush1.msra.mxu0 0.0
  %238 = vmatprep.subr.mxu0 0.0
  %239 = vmatpush1.msra.mxu0 0.0
  %240 = vmatprep.subr.mxu0 0.0
  %241 = vmatpush1.msra.mxu0 0.0
  %242 = vmatprep.subr.mxu0 0.0
  %243 = vmatpush1.msra.mxu0 0.0
  %244 = vmatprep.subr.mxu0 0.0
  %245 = vmatpush1.msra.mxu0 0.0
  %246 = vmatprep.subr.mxu0 0.0
  %247 = vmatpush1.msra.mxu0 0.0
  %248 = vmatprep.subr.mxu0 0.0
  %249 = vmatpush1.msra.mxu0 0.0
  %250 = vmatprep.subr.mxu0 0.0
  %251 = vmatpush1.msra.mxu0 0.0
  %252 = vmatprep.subr.mxu0 0.0
  %253 = vmatpush1.msra.mxu0 0.0
  %254 = vmatprep.mubr.f32.mxu0 0.0
  %255 = vmatmul.mubr.f32.gmra.mrb[0].mxu0 %v32
  %v256 = vpop.f32.mrb[0].mxu0
  %v257 = vadd.f32 %v187, %v256
  %v258 = vpop.f32.mrb[0].mxu0
  %259 = vdwg.mxu0
  %vm260 = vcmask 31744
  %261 = vst.msk [vmem:[%s5] sm:$0xff] %vm260, %v257
  // Predicated region
  $region22: #{tpu_custom_call.1} parent=0 // pred_check
    _
  $region23: #{tpu_custom_call.1} parent=0 // pred_check_branch
    %263 = sbr.rel (0) target = $region25
  $region24: #{tpu_custom_call.1} parent=0 // pred_region
    _
  $region25: #{tpu_custom_call.1} parent=0 // pred_fallthru
    _
  // Predicated region
  $region26: #{tpu_custom_call.1} parent=0 // pred_check
    _
  $region27: #{tpu_custom_call.1} parent=0 // pred_check_branch
    %265 = sbr.rel (0) target = $region29
  $region28: #{tpu_custom_call.1} parent=0 // pred_region
    _
  $region29: #{tpu_custom_call.1} parent=0 // pred_fallthru
    _

</llo_original>
